<compile_context>
chip_gen: v7x
topology: tpu7x:2x2x1
jax: 0.10.0
libtpu: 0.0.40
codegen_flags: <defaults>
</compile_context>

<pallas_src>
import jax
import jax.numpy as jnp
from jax.experimental import pallas as pl
from jax.experimental.pallas import tpu as pltpu


# ----------------------------------------------------------------------------
# Kernel body
# ----------------------------------------------------------------------------
def _make_kernel(eps: float, inv_c: float, out_dtype, half_weight: bool):
    def kernel(x_ref, w_ref, o_ref):
        # Pass 1: mean of squares in f32 (XLU reduce + EUP rsqrt).
        xf = x_ref[...].astype(jnp.float32)                       # [TR, C]
        ms = jnp.sum(xf * xf, axis=-1, keepdims=True) * inv_c     # [TR, 1]
        inv = jax.lax.rsqrt(ms + eps)
        # Pass 2: re-read x (cheap vld + VPU cast) rather than holding the f32
        # temp live across the reduce -> smaller peak VMEM at large tiles.
        y = x_ref[...].astype(jnp.float32) * inv                  # [TR, C] f32
        if half_weight:
            # Torch casts the normalized activations to the half dtype BEFORE
            # multiplying by the (half) weight.
            o_ref[...] = (w_ref[...] * y.astype(out_dtype)).astype(out_dtype)
        else:
            o_ref[...] = (w_ref[...].astype(jnp.float32) * y).astype(out_dtype)

    return kernel


# ----------------------------------------------------------------------------
# Tiling / VMEM budgeting helpers
# ----------------------------------------------------------------------------
def _vmem_capacity_bytes() -> int:
    try:
        return int(pltpu.get_tpu_info().vmem_capacity_bytes)
    except Exception:
        return 128 << 20  # conservative default (v5e/v6e class)


def _sublane_pack(itemsize: int) -> int:
    """Rows per fully-packed sublane group for the given element size."""
    if itemsize >= 4:
        return 8
    if itemsize == 2:
        return 16
    return 32


def _choose_tile_rows(n_rows: int, c: int, in_itemsize: int, out_itemsize: int,
                      vmem_capacity: int) -> int:
    """Row tile: multiple of the dtype pack factor (or the full extent), sized so
    one grid step's resident footprint (in block + out block + f32 intermediate)
    stays around 12 MiB on v7x and 24 MiB on v5e/v6e."""
    pack = _sublane_pack(in_itemsize)
    if n_rows <= pack:
        return n_rows  # full extent is always a legal block shape
    # Real per-row footprint: input block + output block + f32 live intermediate.
    bytes_per_row = c * (in_itemsize + out_itemsize + 4)
    budget = (12 << 20) if vmem_capacity <= (64 << 20) else (24 << 20)
    tr = max(pack, budget // bytes_per_row)
    tr = min(tr, 4096, n_rows)
    tr = max(pack, (tr // pack) * pack)
    return tr


def _vmem_limit_bytes(tr: int, c: int, in_itemsize: int, out_itemsize: int,
                      w_itemsize: int, vmem_capacity: int) -> int:
    blk = tr * c
    footprint = (2 * blk * in_itemsize      # double-buffered input tiles
                 + 2 * blk * out_itemsize   # double-buffered output tiles
                 + 2 * blk * 4              # f32 intermediates (conservative)
                 + 2 * c * w_itemsize)      # resident weight
    limit = int(footprint * 1.25) + (1 << 20)
    cap = (48 << 20) if vmem_capacity <= (64 << 20) else (100 << 20)
    return min(max(limit, 32 << 20), cap)


# ----------------------------------------------------------------------------
# Public wrapper
# ----------------------------------------------------------------------------
def t5_layer_norm(x: jax.Array, weight: jax.Array, eps: float = 1e-6) -> jax.Array:
    """x: [B, L, C]; weight: [C]. Returns [B, L, C] with T5LayerNorm semantics."""
    B, L, C = x.shape
    assert weight.shape == (C,)

    half_weight = (weight.dtype == jnp.float16) or (weight.dtype == jnp.bfloat16)
    if half_weight:
        out_dtype = weight.dtype
    else:
        out_dtype = jnp.promote_types(jnp.promote_types(x.dtype, jnp.float32),
                                      weight.dtype)

    n_rows = B * L
    x2 = x.reshape(n_rows, C)
    w2 = weight.reshape(1, C)

    in_item = jnp.dtype(x.dtype).itemsize
    out_item = jnp.dtype(out_dtype).itemsize
    w_item = jnp.dtype(weight.dtype).itemsize
    vmem_cap = _vmem_capacity_bytes()

    tr = _choose_tile_rows(n_rows, C, in_item, out_item, vmem_cap)
    grid = (pl.cdiv(n_rows, tr),)
    vmem_limit = _vmem_limit_bytes(tr, C, in_item, out_item, w_item, vmem_cap)

    kernel = _make_kernel(float(eps), 1.0 / float(C), out_dtype, half_weight)

    out = pl.pallas_call(
        kernel,
        out_shape=jax.ShapeDtypeStruct((n_rows, C), out_dtype),
        grid_spec=pltpu.PrefetchScalarGridSpec(
            num_scalar_prefetch=0,
            grid=grid,
            in_specs=[
                pl.BlockSpec((tr, C), lambda i: (i, 0)),   # x row tile
                pl.BlockSpec((1, C), lambda i: (0, 0)),    # weight, resident
            ],
            out_specs=pl.BlockSpec((tr, C), lambda i: (i, 0)),
        ),
        compiler_params=pltpu.CompilerParams(
            # No cross-tile reduction; lets v7x shard row tiles across both TCs.
            dimension_semantics=("parallel",),
            vmem_limit_bytes=vmem_limit,
        ),
    )(x2, w2)

    return out.reshape(B, L, C)


# ----------------------------------------------------------------------------
# Pure-JAX reference (mirrors the PyTorch forward)
# ----------------------------------------------------------------------------
def _reference(x, weight, eps=1e-6):
    xf = x.astype(jnp.float32)
    inv = jax.lax.rsqrt(jnp.mean(xf * xf, axis=-1, keepdims=True) + eps)
    y = x.astype(jnp.float32) * inv
    if weight.dtype == jnp.float16 or weight.dtype == jnp.bfloat16:
        y = y.astype(weight.dtype)
    return weight * y


if __name__ == "__main__":
    # Small shapes consistent with the module's [B, L, C] forward.
    B, L, C = 2, 16, 128
    eps = 1e-6

    key = jax.random.PRNGKey(0)
    kx, kw = jax.random.split(key)
    x = jax.random.normal(kx, (B, L, C), dtype=jnp.float32)
    # Module initializes weight to ones; perturb deterministically so the scale
    # multiply is actually exercised.
    weight = jnp.ones((C,), jnp.float32) + 0.1 * jax.random.normal(kw, (C,), dtype=jnp.float32)

    out = t5_layer_norm(x, weight, eps=eps)
    out = jax.block_until_ready(out)

    ref = _reference(x, weight, eps=eps)
    assert out.shape == (B, L, C), out.shape
    assert out.dtype == ref.dtype, (out.dtype, ref.dtype)
    assert jnp.allclose(out, ref, atol=1e-5, rtol=1e-5), float(jnp.max(jnp.abs(out - ref)))

    # Exercise the half-precision weight path (cast-before-weight-mul semantics).
    xb = x.astype(jnp.bfloat16)
    wb = weight.astype(jnp.bfloat16)
    outb = jax.block_until_ready(t5_layer_norm(xb, wb, eps=eps))
    refb = _reference(xb, wb, eps=eps)
    assert outb.dtype == refb.dtype, (outb.dtype, refb.dtype)
    assert jnp.allclose(outb.astype(jnp.float32), refb.astype(jnp.float32),
                        atol=3e-2, rtol=3e-2)

    print("KERNEL_OK")
</pallas_src>

<mosaic_0001>
module attributes {stable_mosaic.version = 11 : i64} {
  func.func @kernel(%arg0: i32, %arg1: memref<32x128xf32, #tpu.memory_space<vmem>>, %arg2: memref<1x128xf32, #tpu.memory_space<vmem>>, %arg3: memref<32x128xf32, #tpu.memory_space<vmem>>) attributes {dimension_semantics = [#tpu.dimension_semantics<parallel>], iteration_bounds = array<i64: 1>, scalar_prefetch = 0 : i64, scratch_operands = 0 : i64, tpu.core_type = #tpu.core_type<tc>, window_params = [{transform_indices = @transform_0, window_bounds = array<i64: 32, 128>}, {pipeline_mode = #tpu.pipeline_mode<synchronous>, transform_indices = @transform_1, window_bounds = array<i64: 1, 128>}, {transform_indices = @transform_2, window_bounds = array<i64: 32, 128>}]} {
    %c0 = arith.constant 0 : index
    %c0_0 = arith.constant 0 : index
    %0 = vector.load %arg1[%c0, %c0_0] : memref<32x128xf32, #tpu.memory_space<vmem>>, vector<32x128xf32>
    %1 = arith.mulf %0, %0 : vector<32x128xf32>
    %cst = arith.constant dense<0.000000e+00> : vector<32xf32>
    %2 = vector.multi_reduction <add>, %1, %cst [1] : vector<32x128xf32> to vector<32xf32>
    %3 = vector.shape_cast %2 : vector<32xf32> to vector<32x1xf32>
    %cst_1 = arith.constant 7.812500e-03 : f32
    %4 = vector.broadcast %cst_1 : f32 to vector<32x1xf32>
    %5 = arith.mulf %3, %4 : vector<32x1xf32>
    %cst_2 = arith.constant 9.99999997E-7 : f32
    %6 = vector.broadcast %cst_2 : f32 to vector<32x1xf32>
    %7 = arith.addf %5, %6 : vector<32x1xf32>
    %8 = math.rsqrt %7 : vector<32x1xf32>
    %c0_3 = arith.constant 0 : index
    %c0_4 = arith.constant 0 : index
    %9 = vector.load %arg1[%c0_3, %c0_4] : memref<32x128xf32, #tpu.memory_space<vmem>>, vector<32x128xf32>
    %10 = vector.broadcast %8 : vector<32x1xf32> to vector<32x128xf32>
    %11 = arith.mulf %9, %10 : vector<32x128xf32>
    %c0_5 = arith.constant 0 : index
    %c0_6 = arith.constant 0 : index
    %12 = vector.load %arg2[%c0_5, %c0_6] : memref<1x128xf32, #tpu.memory_space<vmem>>, vector<1x128xf32>
    %13 = vector.broadcast %12 : vector<1x128xf32> to vector<32x128xf32>
    %14 = arith.mulf %13, %11 : vector<32x128xf32>
    %c0_7 = arith.constant 0 : index
    %c0_8 = arith.constant 0 : index
    %15 = vector.load %arg3[%c0_7, %c0_8] : memref<32x128xf32, #tpu.memory_space<vmem>>, vector<32x128xf32>
    tpu.vector_store %arg3[%c0_7, %c0_8], %14 {strides = array<i32>} : memref<32x128xf32, #tpu.memory_space<vmem>>, vector<32x128xf32>,
    return
  }
  func.func @transform_0(%arg0: i32) -> (i32, i32) {
    %c0_i32 = arith.constant 0 : i32
    %c0_i32_0 = arith.constant 0 : i32
    return %arg0, %c0_i32 : i32, i32
  }
  func.func @transform_1(%arg0: i32) -> (i32, i32) {
    %c0_i32 = arith.constant 0 : i32
    %c0_i32_0 = arith.constant 0 : i32
    %c0_i32_1 = arith.constant 0 : i32
    return %c0_i32, %c0_i32_0 : i32, i32
  }
  func.func @transform_2(%arg0: i32) -> (i32, i32) {
    %c0_i32 = arith.constant 0 : i32
    %c0_i32_0 = arith.constant 0 : i32
    return %arg0, %c0_i32 : i32, i32
  }
}

</mosaic_0001>

<llo_original>
// kernel: tpu_custom_call.1
$region0: #{tpu_custom_call.1}
  #allocation0 [shape = 'u32[]', space=smem, size = 0x4, offset = 0x4, fixed_abs, tag = 'smem constant byte address 0x4 - core index']
  #allocation1 [shape = 'u32[144,128]{1,0:T(1,128)}', space=vmem, size = 0x12000, scoped, tag = 'internal scratch']
  %s0 = inlined_call_operand.hbm [shape: f32[32,128], index: 0, kind: input, shape index: {}]
  %s1 = inlined_call_operand.vmem [shape: f32[1,128], index: 1, kind: input, shape index: {}]
  %s2 = inlined_call_operand.hbm [shape: f32[32,128], index: 2, kind: output, shape index: {}]
  %s3 = sld [smem:[#allocation0]]
  $region22: #{tpu_custom_call.1} parent=0
    _
  %s5 = ssub.s32 1, %s3
  %s6 = scalar_select 0, %s5, %s3
  $region1: #{tpu_custom_call.1} parent=0
    #allocation2 [shape = 'u8[16384]{0}', space=vmem, size = 0x4000, scoped, tag = 'input window, operand 0, single buffered']
    #allocation3 [shape = 's32[1]{0}', space=sflag, size = 0x4, scoped, tag = 'scoped memory for tpu_custom_call.1']
    #allocation4 [shape = 's32[1]{0}', space=sflag, size = 0x4, scoped, tag = 'scoped memory for tpu_custom_call.1']
    #allocation5 [shape = 'u8[16384]{0}', space=vmem, size = 0x4000, scoped, tag = 'output window, operand 0, single buffered']
    %7 = vsyncpa [#allocation3], 0
    %8 = vsyncpa [#allocation4], 0
    // Predicated region
    $region2: #{tpu_custom_call.1} parent=1 // pred_check
      _
    $region3: #{tpu_custom_call.1} parent=1 // pred_check_branch
      %10 = sbr.rel (0) target = $region5
    $region4: #{tpu_custom_call.1} parent=1 // pred_region
      %s12 = ssub.s32 512, 512
      %13 = vsyncadd [#allocation3], %s12
      %s14 = sshll.u32 [#allocation2], 4
      %s15 = int_to_ptr.vmem [resolvable:$true] %s14
      %20 = dma.hbm_to_vmem [thread:$0]  %s0, 512, %s15, [#allocation3], 128, 128, 8
    $region5: #{tpu_custom_call.1} parent=1 // pred_fallthru
      _
    // Predicated region
    $region6: #{tpu_custom_call.1} parent=1 // pred_check
      _
    $region7: #{tpu_custom_call.1} parent=1 // pred_check_branch
      %22 = sbr.rel (0) target = $region9
    $region8: #{tpu_custom_call.1} parent=1 // pred_region
      _
    $region9: #{tpu_custom_call.1} parent=1 // pred_fallthru
      _
    // Predicated region
    $region10: #{tpu_custom_call.1} parent=1 // pred_check
      _
    $region11: #{tpu_custom_call.1} parent=1 // pred_check_branch
      %24 = sbr.rel (0) target = $region13
    $region12: #{tpu_custom_call.1} parent=1 // pred_region
      %25 = dma.done [#allocation3], 512
    $region13: #{tpu_custom_call.1} parent=1 // pred_fallthru
      _
    %v26 = vld [vmem:[#allocation2] sm:$0xff]
    %v27 = vld [vmem:[#allocation2 + $0x8] sm:$0xff]
    %v28 = vld [vmem:[#allocation2 + $0x10] sm:$0xff]
    %v29 = vld [vmem:[#allocation2 + $0x18] sm:$0xff]
    %v30 = vmul.f32 %v26, %v26
    %v31 = vmul.f32 %v27, %v27
    %v32 = vmul.f32 %v28, %v28
    %v33 = vmul.f32 %v29, %v29
    %34 = vadd.xlane.f32.xlu0 %v30
    %v35 = vpop.xlane.xlu0 %34
    %36 = vadd.xlane.f32.xlu0 %v31
    %v37 = vpop.xlane.xlu0 %36
    %38 = vadd.xlane.f32.xlu0 %v32
    %v39 = vpop.xlane.xlu0 %38
    %40 = vadd.xlane.f32.xlu0 %v33
    %v41 = vpop.xlane.xlu0 %40
    %v42 = vmul.f32 %v35, 0.0078125
    %v43 = vmul.f32 %v37, 0.0078125
    %v44 = vmul.f32 %v39, 0.0078125
    %v45 = vmul.f32 %v41, 0.0078125
    %v46 = vadd.f32 %v42, 1e-06
    %v47 = vadd.f32 %v43, 1e-06
    %v48 = vadd.f32 %v44, 1e-06
    %v49 = vadd.f32 %v45, 1e-06
    %v50 = vrsqrt.pop %v46
    %v51 = vrsqrt.pop %v47
    %v52 = vrsqrt.pop %v48
    %v53 = vrsqrt.pop %v49
    %v54 = vmul.f32 %v26, %v50
    %v55 = vmul.f32 %v27, %v51
    %v56 = vmul.f32 %v28, %v52
    %v57 = vmul.f32 %v29, %v53
    %v58 = vld [vmem:[%s1] sm:$0x1]
    %v60 = vlaneseq
    %v61 = vshrl.u32 %v60, 7
    %v62 = vsub.s32 0, %v61
    %v63 = vrot.slane %v58, %v62
    %v65 = vmul.f32 %v63, %v54
    %v66 = vmul.f32 %v63, %v55
    %v67 = vmul.f32 %v63, %v56
    %v68 = vmul.f32 %v63, %v57
    %69 = vst [vmem:[#allocation5] sm:$0xff] %v65
    %70 = vst [vmem:[#allocation5 + $0x8] sm:$0xff] %v66
    %71 = vst [vmem:[#allocation5 + $0x10] sm:$0xff] %v67
    %72 = vst [vmem:[#allocation5 + $0x18] sm:$0xff] %v68
    // Predicated region
    $region14: #{tpu_custom_call.1} parent=1 // pred_check
      _
    $region15: #{tpu_custom_call.1} parent=1 // pred_check_branch
      %74 = sbr.rel (0) target = $region17
    $region16: #{tpu_custom_call.1} parent=1 // pred_region
      %s76 = ssub.s32 512, 512
      %77 = vsyncadd [#allocation4], %s76
      %s78 = sshll.u32 [#allocation5], 4
      %s79 = int_to_ptr.vmem [resolvable:$true] %s78
      %84 = dma.vmem_to_hbm [thread:$0]  %s79, 512, %s2, [#allocation4], 128, 128, 8
    $region17: #{tpu_custom_call.1} parent=1 // pred_fallthru
      _
    // Predicated region
    $region18: #{tpu_custom_call.1} parent=1 // pred_check
      _
    $region19: #{tpu_custom_call.1} parent=1 // pred_check_branch
      %86 = sbr.rel (0) target = $region21
    $region20: #{tpu_custom_call.1} parent=1 // pred_region
      %87 = dma.done [#allocation4], 512
    $region21: #{tpu_custom_call.1} parent=1 // pred_fallthru
      _
    %88 = vsyncpa [#allocation3], 1
    %89 = vsyncpa [#allocation4], 1

</llo_original>
